<compile_context>
chip_gen: v5e
topology: v5e:2x2
jax: 0.10.0
libtpu: 0.0.40
codegen_flags: <defaults>
</compile_context>

<pallas_src>
import jax
import jax.numpy as jnp
from jax.experimental import pallas as pl
from jax.experimental.pallas import tpu as pltpu


def _cdiv(a, b):
    return (a + b - 1) // b


def _round_up(x, m):
    return _cdiv(x, m) * m


def _mlp_kernel(x_ref, w1_ref, b1_ref, w2_ref, b2_ref, w3t_ref, b3_ref, o_ref):
    """One batch tile of sigmoid(relu(relu(x@W1+b1)@W2+b2)@W3+b3)."""
    x = x_ref[...]
    if x.dtype != jnp.bfloat16:          # accept bf16 x directly; cast f32 in-kernel
        x = x.astype(jnp.bfloat16)                                     # (TB, F)

    # fc1 + ReLU   (dropout = identity in eval mode)
    h1 = jnp.dot(x, w1_ref[...], preferred_element_type=jnp.float32) + b1_ref[...]
    h1 = jnp.maximum(h1, 0.0)                                          # (TB, H) f32

    # fc2 + ReLU   (dropout = identity in eval mode)
    h2 = jnp.dot(h1.astype(jnp.bfloat16), w2_ref[...],
                 preferred_element_type=jnp.float32) + b2_ref[...]
    h2 = jnp.maximum(h2, 0.0)                                          # (TB, H2) f32

    # fc3 + Sigmoid: output width is 1, so skip the MXU (would use 1/256 lanes)
    # and do a VPU multiply + cross-lane reduce. Transpose the tiny (TB, 1)
    # column to a lane-dense (1, TB) row BEFORE sigmoid so the EUP work and the
    # output store run on full vregs (lane-dense out_spec).
    logit_col = jnp.sum(h2 * w3t_ref[...], axis=-1, keepdims=True)     # (TB, 1)
    logit_row = jnp.transpose(logit_col) + b3_ref[...]                 # (1, TB)
    prob = pl.reciprocal(1.0 + jnp.exp(-logit_row), approx=True)       # sigmoid
    o_ref[0] = prob                                                    # (1, TB) slice of (1,1,TB)


def _pick_batch_tile(B, F, H, H2, x_itemsize, vmem_cap, batch_tile):
    """Batch tile sized from this generation's VMEM; >=2 tiles for big batches."""
    if batch_tile is None:
        # Fill ~1/4 of VMEM with the (up to triple-buffered) x stream + activations.
        budget = vmem_cap // 4
        per_row = 3 * F * x_itemsize + (H + H2) * 4 + (F + H) * 2 + 8
        tb = budget // max(per_row, 1)
        tb = max(256, min(int(tb), 4096))
        tb = (tb // 128) * 128
    else:
        tb = max(8, (int(batch_tile) // 8) * 8)
    # Guarantee >= 2 batch tiles once the batch is big enough so the "parallel"
    # grid axis can actually shard across v7x's two TensorCores.
    if B > 512:
        tb = min(tb, _round_up(_cdiv(B, 2), 128))
    if B <= tb:
        return B          # single block spanning the full batch dim (layout-legal)
    return tb


def sentiment_classifier_forward(x, params, *, batch_tile=None):
    """Fused forward pass of SentimentClassifier (eval mode).

    x: (B, F), float32 or bfloat16 (bf16 is streamed directly, no extra pass).
    Note: matmuls run with bf16 operands on the MXU, so results differ from a
    pure-f32 reference at ~1e-2 level (inference-grade accuracy).
    """
    w1, b1, w2, b2, w3, b3 = params
    B, F = x.shape
    H = w1.shape[1]
    H2 = w2.shape[1]
    x_itemsize = jnp.dtype(x.dtype).itemsize

    # Generation-aware VMEM budget (v7x: 64 MiB physical; v5e/v6e: 128 MiB).
    try:
        vmem_cap = int(pltpu.get_tpu_info().vmem_capacity_bytes)
    except Exception:
        vmem_cap = 64 * 1024 * 1024
    vmem_ceiling = int(0.80 * vmem_cap)   # headroom for Mosaic internal scratch

    TB = _pick_batch_tile(B, F, H, H2, x_itemsize, vmem_cap, batch_tile)
    num_tiles = _cdiv(B, TB)   # last x block may be partial; its garbage rows only
                               # produce output rows that are sliced off below.

    # bf16 weights for the MXU (halves HBM/VMEM weight bytes); the fc3 row and
    # all biases stay f32 (VPU / bias-add path).
    w1b = w1.astype(jnp.bfloat16)
    w2b = w2.astype(jnp.bfloat16)
    b1r = b1.reshape(1, H).astype(jnp.float32)
    b2r = b2.reshape(1, H2).astype(jnp.float32)
    w3t = w3.reshape(1, H2).astype(jnp.float32)
    b3r = b3.reshape(1, 1).astype(jnp.float32)

    # Deepen the x prefetch pipeline only when tiles are small and there are
    # enough grid steps to benefit.
    x_tile_bytes = TB * F * x_itemsize
    if num_tiles >= 3 and x_tile_bytes <= (1 << 20):
        n_x_buf = 3
        x_spec = pl.BlockSpec((TB, F), lambda i: (i, 0),
                              pipeline_mode=pl.Buffered(3))
    else:
        n_x_buf = 2
        x_spec = pl.BlockSpec((TB, F), lambda i: (i, 0))

    # Same block index every grid step -> stays VMEM-resident across tiles.
    # TODO(synk): if these constant-index blocks are double-buffered by the
    # pipeline, pl.Buffered(1) on them would reclaim VMEM for very large F.
    def resident(shape):
        return pl.BlockSpec(shape, lambda i, _s=shape: tuple(0 for _ in _s))

    weight_bytes = (w1b.size * 2 + w2b.size * 2
                    + (b1r.size + b2r.size + w3t.size + b3r.size) * 4)
    act_bytes = TB * (H + H2) * 4 + TB * (F + H) * 2
    needed = n_x_buf * x_tile_bytes + 2 * TB * 4 + 2 * weight_bytes + act_bytes
    vmem_limit = int(min(max(2 * needed, 32 * 1024 * 1024), vmem_ceiling))

    cost = pl.CostEstimate(
        flops=int(2 * B * (F * H + H * H2 + H2)),
        transcendentals=int(2 * B),                      # exp + reciprocal per sigmoid
        bytes_accessed=int(B * F * x_itemsize + weight_bytes + 4 * B),
    )

    out = pl.pallas_call(
        _mlp_kernel,
        out_shape=jax.ShapeDtypeStruct((num_tiles, 1, TB), jnp.float32),
        grid=(num_tiles,),
        in_specs=[
            x_spec,                      # x: tiled over batch, auto-pipelined
            resident((F, H)),            # w1 (bf16)
            resident((1, H)),            # b1
            resident((H, H2)),           # w2 (bf16)
            resident((1, H2)),           # b2
            resident((1, H2)),           # w3 row (f32, VPU path)
            resident((1, 1)),            # b3
        ],
        out_specs=pl.BlockSpec((1, 1, TB), lambda i: (i, 0, 0)),  # lane-dense stores
        compiler_params=pltpu.CompilerParams(
            dimension_semantics=("parallel",),           # megacore sharding on v7x
            vmem_limit_bytes=vmem_limit,
        ),
        cost_estimate=cost,
    )(x, w1b, b1r, w2b, b2r, w3t, b3r)

    # (num_tiles, 1, TB) lane-dense slab -> (B, 1); any tail rows are discarded.
    return out.reshape(num_tiles * TB, 1)[:B]


def init_params(key, input_size, hidden_size=128):
    """Deterministic init matching nn.Linear default: U(-1/sqrt(in), 1/sqrt(in)).
    Weights stored as (in, out); biases kept 2D (1, out) for TPU layout."""
    h2 = hidden_size // 2
    ks = jax.random.split(key, 6)

    def lin(kw, kb, fan_in, fan_out):
        bound = 1.0 / jnp.sqrt(jnp.float32(fan_in))
        w = jax.random.uniform(kw, (fan_in, fan_out), jnp.float32, -bound, bound)
        b = jax.random.uniform(kb, (1, fan_out), jnp.float32, -bound, bound)
        return w, b

    w1, b1 = lin(ks[0], ks[1], input_size, hidden_size)
    w2, b2 = lin(ks[2], ks[3], hidden_size, h2)
    w3, b3 = lin(ks[4], ks[5], h2, 1)
    return (w1, b1, w2, b2, w3, b3)


def reference_forward(x, params):
    """Plain-JAX reference (eval-mode dropout = identity), all f32."""
    w1, b1, w2, b2, w3, b3 = params
    h1 = jnp.maximum(x @ w1 + b1, 0.0)
    h2 = jnp.maximum(h1 @ w2 + b2, 0.0)
    return jax.nn.sigmoid(h2 @ w3 + b3)


if __name__ == "__main__":
    key = jax.random.PRNGKey(0)
    k_x, k_p = jax.random.split(key)

    batch = 10           # deliberately not a multiple of 8 (full-extent block path)
    input_size = 32
    hidden_size = 32     # small, consistent with the module (default 128)

    x = jax.random.normal(k_x, (batch, input_size), dtype=jnp.float32)
    params = init_params(k_p, input_size, hidden_size)

    out = sentiment_classifier_forward(x, params)
    out = jax.block_until_ready(out)

    ref = reference_forward(x, params)
    assert out.shape == (batch, 1), out.shape
    # bf16 matmul operands + approx reciprocal -> loosened tolerance vs pure f32.
    assert jnp.allclose(out, ref, atol=2e-2, rtol=2e-2), "mismatch vs reference"

    print("KERNEL_OK")
</pallas_src>

<mosaic_0001>
module attributes {stable_mosaic.version = 11 : i64} {
  func.func @_mlp_kernel(%arg0: i32, %arg1: memref<10x32xf32, #tpu.memory_space<vmem>>, %arg2: memref<32x32xbf16, #tpu.memory_space<vmem>>, %arg3: memref<1x32xf32, #tpu.memory_space<vmem>>, %arg4: memref<32x16xbf16, #tpu.memory_space<vmem>>, %arg5: memref<1x16xf32, #tpu.memory_space<vmem>>, %arg6: memref<1x16xf32, #tpu.memory_space<vmem>>, %arg7: memref<1x1xf32, #tpu.memory_space<vmem>>, %arg8: memref<1x1x10xf32, #tpu.memory_space<vmem>>) attributes {dimension_semantics = [#tpu.dimension_semantics<parallel>], iteration_bounds = array<i64: 1>, scalar_prefetch = 0 : i64, scratch_operands = 0 : i64, tpu.core_type = #tpu.core_type<tc>, window_params = [{transform_indices = @transform_0, window_bounds = array<i64: 10, 32>}, {pipeline_mode = #tpu.pipeline_mode<synchronous>, transform_indices = @transform_1, window_bounds = array<i64: 32, 32>}, {pipeline_mode = #tpu.pipeline_mode<synchronous>, transform_indices = @transform_2, window_bounds = array<i64: 1, 32>}, {pipeline_mode = #tpu.pipeline_mode<synchronous>, transform_indices = @transform_3, window_bounds = array<i64: 32, 16>}, {pipeline_mode = #tpu.pipeline_mode<synchronous>, transform_indices = @transform_4, window_bounds = array<i64: 1, 16>}, {pipeline_mode = #tpu.pipeline_mode<synchronous>, transform_indices = @transform_5, window_bounds = array<i64: 1, 16>}, {pipeline_mode = #tpu.pipeline_mode<synchronous>, transform_indices = @transform_6, window_bounds = array<i64: 1, 1>}, {transform_indices = @transform_7, window_bounds = array<i64: 1, 1, 10>}]} {
    %c0 = arith.constant 0 : index
    %c0_0 = arith.constant 0 : index
    %0 = vector.load %arg1[%c0, %c0_0] : memref<10x32xf32, #tpu.memory_space<vmem>>, vector<10x32xf32>
    %1 = arith.truncf %0 : vector<10x32xf32> to vector<10x32xbf16>
    %c0_1 = arith.constant 0 : index
    %c0_2 = arith.constant 0 : index
    %2 = vector.load %arg2[%c0_1, %c0_2] : memref<32x32xbf16, #tpu.memory_space<vmem>>, vector<32x32xbf16>
    %cst = arith.constant dense<0.000000e+00> : vector<10x32xf32>
    %3 = tpu.matmul %1, %2, %cst {dimension_numbers = #tpu.dot_dimension_numbers<[1], [0], [0], [1], [0, 0, 1, 1], [], []>} : vector<10x32xbf16>, vector<32x32xbf16>, vector<10x32xf32> -> vector<10x32xf32>
    %c0_3 = arith.constant 0 : index
    %c0_4 = arith.constant 0 : index
    %4 = vector.load %arg3[%c0_3, %c0_4] : memref<1x32xf32, #tpu.memory_space<vmem>>, vector<1x32xf32>
    %5 = vector.broadcast %4 : vector<1x32xf32> to vector<10x32xf32>
    %6 = arith.addf %3, %5 : vector<10x32xf32>
    %cst_5 = arith.constant 0.000000e+00 : f32
    %7 = vector.broadcast %cst_5 : f32 to vector<10x32xf32>
    %8 = arith.maximumf %6, %7 : vector<10x32xf32>
    %9 = arith.truncf %8 : vector<10x32xf32> to vector<10x32xbf16>
    %c0_6 = arith.constant 0 : index
    %c0_7 = arith.constant 0 : index
    %10 = vector.load %arg4[%c0_6, %c0_7] : memref<32x16xbf16, #tpu.memory_space<vmem>>, vector<32x16xbf16>
    %cst_8 = arith.constant dense<0.000000e+00> : vector<10x16xf32>
    %11 = tpu.matmul %9, %10, %cst_8 {dimension_numbers = #tpu.dot_dimension_numbers<[1], [0], [0], [1], [0, 0, 1, 1], [], []>} : vector<10x32xbf16>, vector<32x16xbf16>, vector<10x16xf32> -> vector<10x16xf32>
    %c0_9 = arith.constant 0 : index
    %c0_10 = arith.constant 0 : index
    %12 = vector.load %arg5[%c0_9, %c0_10] : memref<1x16xf32, #tpu.memory_space<vmem>>, vector<1x16xf32>
    %13 = vector.broadcast %12 : vector<1x16xf32> to vector<10x16xf32>
    %14 = arith.addf %11, %13 : vector<10x16xf32>
    %cst_11 = arith.constant 0.000000e+00 : f32
    %15 = vector.broadcast %cst_11 : f32 to vector<10x16xf32>
    %16 = arith.maximumf %14, %15 : vector<10x16xf32>
    %c0_12 = arith.constant 0 : index
    %c0_13 = arith.constant 0 : index
    %17 = vector.load %arg6[%c0_12, %c0_13] : memref<1x16xf32, #tpu.memory_space<vmem>>, vector<1x16xf32>
    %18 = vector.broadcast %17 : vector<1x16xf32> to vector<10x16xf32>
    %19 = arith.mulf %16, %18 : vector<10x16xf32>
    %cst_14 = arith.constant dense<0.000000e+00> : vector<10xf32>
    %20 = vector.multi_reduction <add>, %19, %cst_14 [1] : vector<10x16xf32> to vector<10xf32>
    %21 = vector.shape_cast %20 : vector<10xf32> to vector<10x1xf32>
    %22 = tpu.transpose %21, [1, 0] : vector<10x1xf32> -> vector<1x10xf32>
    %c0_15 = arith.constant 0 : index
    %c0_16 = arith.constant 0 : index
    %23 = vector.load %arg7[%c0_15, %c0_16] : memref<1x1xf32, #tpu.memory_space<vmem>>, vector<1x1xf32>
    %24 = vector.broadcast %23 : vector<1x1xf32> to vector<1x10xf32>
    %25 = arith.addf %22, %24 : vector<1x10xf32>
    %cst_17 = arith.constant 0.000000e+00 : f32
    %26 = vector.broadcast %cst_17 : f32 to vector<1x10xf32>
    %27 = arith.subf %26, %25 : vector<1x10xf32>
    %28 = math.exp %27 : vector<1x10xf32>
    %cst_18 = arith.constant 1.000000e+00 : f32
    %29 = vector.broadcast %cst_18 : f32 to vector<1x10xf32>
    %30 = arith.addf %29, %28 : vector<1x10xf32>
    %31 = tpu.reciprocal %30 {approx = true} : vector<1x10xf32> -> vector<1x10xf32>
    %c0_19 = arith.constant 0 : index
    %c0_20 = arith.constant 0 : index
    %c0_21 = arith.constant 0 : index
    %32 = vector.load %arg8[%c0_19, %c0_20, %c0_21] : memref<1x1x10xf32, #tpu.memory_space<vmem>>, vector<1x1x10xf32>
    %33 = vector.shape_cast %32 : vector<1x1x10xf32> to vector<1x10xf32>
    %34 = vector.shape_cast %31 : vector<1x10xf32> to vector<1x1x10xf32>
    tpu.vector_store %arg8[%c0_19, %c0_20, %c0_21], %34 {strides = array<i32>} : memref<1x1x10xf32, #tpu.memory_space<vmem>>, vector<1x1x10xf32>,
    return
  }
  func.func @transform_0(%arg0: i32) -> (i32, i32) {
    %c0_i32 = arith.constant 0 : i32
    %c0_i32_0 = arith.constant 0 : i32
    return %arg0, %c0_i32 : i32, i32
  }
  func.func @transform_1(%arg0: i32) -> (i32, i32) {
    %c0_i32 = arith.constant 0 : i32
    %c0_i32_0 = arith.constant 0 : i32
    %c0_i32_1 = arith.constant 0 : i32
    return %c0_i32, %c0_i32_0 : i32, i32
  }
  func.func @transform_2(%arg0: i32) -> (i32, i32) {
    %c0_i32 = arith.constant 0 : i32
    %c0_i32_0 = arith.constant 0 : i32
    %c0_i32_1 = arith.constant 0 : i32
    return %c0_i32, %c0_i32_0 : i32, i32
  }
  func.func @transform_3(%arg0: i32) -> (i32, i32) {
    %c0_i32 = arith.constant 0 : i32
    %c0_i32_0 = arith.constant 0 : i32
    %c0_i32_1 = arith.constant 0 : i32
    return %c0_i32, %c0_i32_0 : i32, i32
  }
  func.func @transform_4(%arg0: i32) -> (i32, i32) {
    %c0_i32 = arith.constant 0 : i32
    %c0_i32_0 = arith.constant 0 : i32
    %c0_i32_1 = arith.constant 0 : i32
    return %c0_i32, %c0_i32_0 : i32, i32
  }
  func.func @transform_5(%arg0: i32) -> (i32, i32) {
    %c0_i32 = arith.constant 0 : i32
    %c0_i32_0 = arith.constant 0 : i32
    %c0_i32_1 = arith.constant 0 : i32
    return %c0_i32, %c0_i32_0 : i32, i32
  }
  func.func @transform_6(%arg0: i32) -> (i32, i32) {
    %c0_i32 = arith.constant 0 : i32
    %c0_i32_0 = arith.constant 0 : i32
    %c0_i32_1 = arith.constant 0 : i32
    return %c0_i32, %c0_i32_0 : i32, i32
  }
  func.func @transform_7(%arg0: i32) -> (i32, i32, i32) {
    %c0_i32 = arith.constant 0 : i32
    %c0_i32_0 = arith.constant 0 : i32
    %c0_i32_1 = arith.constant 0 : i32
    return %arg0, %c0_i32, %c0_i32_0 : i32, i32, i32
  }
}

</mosaic_0001>

<llo_original>
// kernel: tpu_custom_call.1
$region0: #{tpu_custom_call.1}
  #allocation0 [shape = 'u32[]', space=smem, size = 0x4, offset = 0x4, fixed_abs, tag = 'smem constant byte address 0x4 - core index']
  #allocation1 [shape = 'u32[72,128]{1,0:T(1,128)}', space=vmem, size = 0x9000, scoped, tag = 'internal scratch']
  #allocation2 [shape = 'f32[1,1]{1,0:T(1,128)S(1)}', space=vmem, size = 0x200, scoped, tag = 'scoped memory for tpu_custom_call.1']
  %s0 = inlined_call_operand.vmem [shape: f32[10,32], index: 0, kind: input, shape index: {}]
  %s1 = inlined_call_operand.hbm [shape: bf16[32,32], index: 1, kind: input, shape index: {}]
  %s2 = inlined_call_operand.vmem [shape: f32[1,32], index: 2, kind: input, shape index: {}]
  %s3 = inlined_call_operand.vmem [shape: bf16[32,16], index: 3, kind: input, shape index: {}]
  %s4 = inlined_call_operand.vmem [shape: f32[1,16], index: 4, kind: input, shape index: {}]
  %s5 = inlined_call_operand.vmem [shape: f32[1,16], index: 5, kind: input, shape index: {}]
  %s6 = inlined_call_operand.<no memory space> [shape: f32[1,1], index: 6, kind: input, shape index: {}]
  %s7 = inlined_call_operand.hbm [shape: f32[1,1,10], index: 7, kind: output, shape index: {}]
  %s8 = sld [smem:[#allocation0]]
  $region42: #{tpu_custom_call.1} parent=0
    _
  %s10 = ssub.s32 1, %s8
  %s11 = scalar_select 0, %s10, %s8
  %v12 = vstv %s6
  %13 = vst [vmem:[#allocation2] sm:$0x1] %v12
  $region1: #{tpu_custom_call.1} parent=0
    #allocation3 [shape = 'u8[8192]{0}', space=vmem, size = 0x2000, scoped, tag = 'input window, operand 1, single buffered']
    #allocation4 [shape = 's32[1]{0}', space=sflag, size = 0x4, scoped, tag = 'scoped memory for tpu_custom_call.1']
    #allocation5 [shape = 's32[1]{0}', space=sflag, size = 0x4, scoped, tag = 'scoped memory for tpu_custom_call.1']
    #allocation6 [shape = 'u8[512]{0}', space=vmem, size = 0x400, scoped, tag = 'output window, operand 0, single buffered']
    %14 = vsyncpa [#allocation4], 0
    %15 = vsyncpa [#allocation5], 0
    // Predicated region
    $region2: #{tpu_custom_call.1} parent=1 // pred_check
      _
    $region3: #{tpu_custom_call.1} parent=1 // pred_check_branch
      %17 = sbr.rel (0) target = $region5
    $region4: #{tpu_custom_call.1} parent=1 // pred_region
      _
    $region5: #{tpu_custom_call.1} parent=1 // pred_fallthru
      _
    // Predicated region
    $region6: #{tpu_custom_call.1} parent=1 // pred_check
      _
    $region7: #{tpu_custom_call.1} parent=1 // pred_check_branch
      %19 = sbr.rel (0) target = $region9
    $region8: #{tpu_custom_call.1} parent=1 // pred_region
      %21 = vsyncadd [#allocation4], 0
      %s22 = sshll.u32 %s1, 4
      %s23 = int_to_ptr.hbm [resolvable:$true] %s22
      %s24 = sshll.u32 [#allocation3], 4
      %s25 = int_to_ptr.vmem [resolvable:$true] %s24
      %30 = dma.hbm_to_vmem [thread:$0]  %s23, 256, %s25, [#allocation4], 64, 64, 4
    $region9: #{tpu_custom_call.1} parent=1 // pred_fallthru
      _
    // Predicated region
    $region10: #{tpu_custom_call.1} parent=1 // pred_check
      _
    $region11: #{tpu_custom_call.1} parent=1 // pred_check_branch
      %32 = sbr.rel (0) target = $region13
    $region12: #{tpu_custom_call.1} parent=1 // pred_region
      _
    $region13: #{tpu_custom_call.1} parent=1 // pred_fallthru
      _
    // Predicated region
    $region14: #{tpu_custom_call.1} parent=1 // pred_check
      _
    $region15: #{tpu_custom_call.1} parent=1 // pred_check_branch
      %34 = sbr.rel (0) target = $region17
    $region16: #{tpu_custom_call.1} parent=1 // pred_region
      _
    $region17: #{tpu_custom_call.1} parent=1 // pred_fallthru
      _
    // Predicated region
    $region18: #{tpu_custom_call.1} parent=1 // pred_check
      _
    $region19: #{tpu_custom_call.1} parent=1 // pred_check_branch
      %36 = sbr.rel (0) target = $region21
    $region20: #{tpu_custom_call.1} parent=1 // pred_region
      _
    $region21: #{tpu_custom_call.1} parent=1 // pred_fallthru
      _
    // Predicated region
    $region22: #{tpu_custom_call.1} parent=1 // pred_check
      _
    $region23: #{tpu_custom_call.1} parent=1 // pred_check_branch
      %38 = sbr.rel (0) target = $region25
    $region24: #{tpu_custom_call.1} parent=1 // pred_region
      _
    $region25: #{tpu_custom_call.1} parent=1 // pred_fallthru
      _
    // Predicated region
    $region26: #{tpu_custom_call.1} parent=1 // pred_check
      _
    $region27: #{tpu_custom_call.1} parent=1 // pred_check_branch
      %40 = sbr.rel (0) target = $region29
    $region28: #{tpu_custom_call.1} parent=1 // pred_region
      _
    $region29: #{tpu_custom_call.1} parent=1 // pred_fallthru
      _
    // Predicated region
    $region30: #{tpu_custom_call.1} parent=1 // pred_check
      _
    $region31: #{tpu_custom_call.1} parent=1 // pred_check_branch
      %42 = sbr.rel (0) target = $region33
    $region32: #{tpu_custom_call.1} parent=1 // pred_region
      %44 = dma.done [#allocation4], 256
    $region33: #{tpu_custom_call.1} parent=1 // pred_fallthru
      _
    %v46 = vld [vmem:[%s0] sm:$0xff]
    %v47 = vld [vmem:[%s0 + $0x8] sm:$0x3]
    %v48 = vpack.c.bf16 %v47, %v46
    %v49 = vld [vmem:[#allocation3] sm:$0xf]
    %v50 = vld [vmem:[#allocation3 + $0x4] sm:$0xf]
    %v51 = vld [vmem:[#allocation3 + $0x8] sm:$0xf]
    %v52 = vld [vmem:[#allocation3 + $0xc] sm:$0xf]
    %v53 = vld [vmem:[%s2] sm:$0x1]
    %v55 = vperm.slane %v53, 0
    %v61 = vunpack.c.l.b16 %v49
    %v62 = vunpack.c.l.b16 %v50
    %v63 = vunpack.c.l.b16 %v51
    %v64 = vunpack.c.l.b16 %v52
    %v65 = vpack.c.b16 %v62, %v61
    %v66 = vpack.c.b16 %v64, %v63
    %vm69 = vcmask 261120
    %v71 = vsel %vm69, %v48, 0
    %73 = vmatpush.bf16.msra.mxu0 0
    %74 = vmatpush.bf16.msra.mxu0 0
    %75 = vmatpush.bf16.msra.mxu0 0
    %76 = vmatpush.bf16.msra.mxu0 0
    %77 = vmatpush.bf16.msra.mxu0 0
    %78 = vmatpush.bf16.msra.mxu0 0
    %79 = vmatpush.bf16.msra.mxu0 %v66
    %80 = vmatpush.bf16.msra.mxu0 %v65
    %81 = vmatmul.bf16.gmra.mxu0 %v71
    %v82 = vpop.f32.mrf.mxu0
    %v83 = vadd.f32 %v55, %v82
    %v84 = vpop.f32.mrf.mxu0
    %v85 = vadd.f32 %v55, %v84
    %86 = vdwg.mxu0
    %v87 = vmax.f32 %v83, 0.0
    %v88 = vmax.f32 %v85, 0.0
    %v89 = vpack.c.bf16 %v88, %v87
    %v90 = vld [vmem:[%s3] sm:$0xf]
    %v91 = vld [vmem:[%s3 + $0x4] sm:$0xf]
    %v92 = vld [vmem:[%s3 + $0x8] sm:$0xf]
    %v93 = vld [vmem:[%s3 + $0xc] sm:$0xf]
    %v94 = vld [vmem:[%s4] sm:$0x1]
    %v96 = vperm.slane %v94, 0
    %v102 = vunpack.c.l.b16 %v90
    %v103 = vunpack.c.l.b16 %v91
    %v104 = vunpack.c.l.b16 %v92
    %v105 = vunpack.c.l.b16 %v93
    %v106 = vpack.c.b16 %v103, %v102
    %v107 = vpack.c.b16 %v105, %v104
    %v111 = vsel %vm69, %v89, 0
    %113 = vmatpush.bf16.msra.mxu0 0
    %114 = vmatpush.bf16.msra.mxu0 0
    %115 = vmatpush.bf16.msra.mxu0 0
    %116 = vmatpush.bf16.msra.mxu0 0
    %117 = vmatpush.bf16.msra.mxu0 0
    %118 = vmatpush.bf16.msra.mxu0 0
    %119 = vmatpush.bf16.msra.mxu0 %v107
    %120 = vmatpush.bf16.msra.mxu0 %v106
    %121 = vmatmul.bf16.gmra.mxu0 %v111
    %v122 = vpop.f32.mrf.mxu0
    %v123 = vadd.f32 %v96, %v122
    %v124 = vpop.f32.mrf.mxu0
    %v125 = vadd.f32 %v96, %v124
    %126 = vdwg.mxu0
    %v127 = vmax.f32 %v123, 0.0
    %v128 = vmax.f32 %v125, 0.0
    %v129 = vld [vmem:[%s5] sm:$0x1]
    %v131 = vperm.slane %v129, 0
    %v133 = vmul.f32 %v127, %v131
    %v134 = vmul.f32 %v128, %v131
    %vm135 = vcmask 130048
    %v136 = vsel %vm135, %v133, 0.0
    %137 = vadd.xlane.f32.xlu0 %v136
    %v138 = vpop.xlane.xlu0 %137
    %vm139 = vcmask 123904
    %v140 = vsel %vm139, %v134, 0.0
    %141 = vadd.xlane.f32.xlu0 %v140
    %v142 = vpop.xlane.xlu0 %141
    %143 = vxpose.xlu0.b32.start [1/16] %v138, 128
    %144 = vxpose.xlu0.b32.cont [2/16] %v142, 128
    %145 = vxpose.xlu0.b32.cont [3/16] 0.0, 128
    %146 = vxpose.xlu0.b32.cont [4/16] 0.0, 128
    %147 = vxpose.xlu0.b32.cont [5/16] 0.0, 128
    %148 = vxpose.xlu0.b32.cont [6/16] 0.0, 128
    %149 = vxpose.xlu0.b32.cont [7/16] 0.0, 128
    %150 = vxpose.xlu0.b32.cont [8/16] 0.0, 128
    %151 = vxpose.xlu0.b32.cont [9/16] 0.0, 128
    %152 = vxpose.xlu0.b32.cont [10/16] 0.0, 128
    %153 = vxpose.xlu0.b32.cont [11/16] 0.0, 128
    %154 = vxpose.xlu0.b32.cont [12/16] 0.0, 128
    %155 = vxpose.xlu0.b32.cont [13/16] 0.0, 128
    %156 = vxpose.xlu0.b32.cont [14/16] 0.0, 128
    %157 = vxpose.xlu0.b32.cont [15/16] 0.0, 128
    %158 = vxpose.xlu0.b32.end [16/16] 0.0, 128
    %v159 = vpop.trf.xlu0
    %v160 = vpop.trf.xlu0
    %v161 = vpop.trf.xlu0
    %v162 = vpop.trf.xlu0
    %v163 = vpop.trf.xlu0
    %v164 = vpop.trf.xlu0
    %v165 = vpop.trf.xlu0
    %v166 = vpop.trf.xlu0
    %v167 = vpop.trf.xlu0
    %v168 = vpop.trf.xlu0
    %v169 = vpop.trf.xlu0
    %v170 = vpop.trf.xlu0
    %v171 = vpop.trf.xlu0
    %v172 = vpop.trf.xlu0
    %v173 = vpop.trf.xlu0
    %v174 = vpop.trf.xlu0
    %v175 = vld [vmem:[#allocation2] sm:$0x1]
    %177 = vset.pattern.permute.xlu0 0
    %178 = vperm.xlu0 %177, %v175
    %v179 = vpop.permute.xlu0 %178
    %v181 = vperm.slane %v179, 0
    %v182 = vadd.f32 %v159, %v181
    %v183 = vsub.f32 0.0, %v182
    %v184 = vmul.f32 %v183, 1.442695
    %v185 = vpow.pop %v184
    %v186 = vadd.f32 %v185, 1.0
    %v187 = vrcp.pop %v186
    %vm188 = vcmask 73728
    %189 = vst.msk [vmem:[#allocation6] sm:$0x1] %vm188, %v187
    // Predicated region
    $region34: #{tpu_custom_call.1} parent=1 // pred_check
      _
    $region35: #{tpu_custom_call.1} parent=1 // pred_check_branch
      %191 = sbr.rel (0) target = $region37
    $region36: #{tpu_custom_call.1} parent=1 // pred_region
      %193 = vsyncadd [#allocation5], 0
      %s195 = sshll.u32 [#allocation6], 4
      %s196 = int_to_ptr.vmem [resolvable:$true] %s195
      %s197 = sshll.u32 %s7, 4
      %s198 = int_to_ptr.hbm [resolvable:$true] %s197
      %200 = dma.vmem_to_hbm [thread:$0]  %s196, 16, %s198, [#allocation5]
    $region37: #{tpu_custom_call.1} parent=1 // pred_fallthru
      _
    // Predicated region
    $region38: #{tpu_custom_call.1} parent=1 // pred_check
      _
    $region39: #{tpu_custom_call.1} parent=1 // pred_check_branch
      %202 = sbr.rel (0) target = $region41
    $region40: #{tpu_custom_call.1} parent=1 // pred_region
      %204 = dma.done [#allocation5], 16
    $region41: #{tpu_custom_call.1} parent=1 // pred_fallthru
      _
    %205 = vsyncpa [#allocation4], 1
    %206 = vsyncpa [#allocation5], 1

</llo_original>
